<compile_context>
chip_gen: v7x
topology: tpu7x:2x2x1
jax: 0.10.0
libtpu: 0.0.40
codegen_flags: <defaults>
</compile_context>

<pallas_src>
import functools

import jax
import jax.numpy as jnp
from jax.experimental import pallas as pl
from jax.experimental.pallas import tpu as pltpu


def _input_embed_kernel(dmin_ref, cont_ref, disc_ref, mbd_ref, bias_ref,
                        out_ref, *, vocab):
    tb = cont_ref.shape[0]
    D = disc_ref.shape[1]
    V = vocab

    # One-hot the offset-corrected discrete indices: integer compare (exact),
    # then cast the 0/1 mask to f32 for the MXU.  Out-of-range indices give an
    # all-zero one-hot row -> zero embedding (same silent behavior as before;
    # inputs are assumed in-range).
    idx = disc_ref[...] - dmin_ref[0]                                 # (tb, D) i32
    iota_v = jax.lax.broadcasted_iota(jnp.int32, (tb, V), 1)
    parts = [cont_ref[...]]                                           # (tb, C) f32
    for j in range(D):
        parts.append((idx[:, j:j + 1] == iota_v).astype(jnp.float32))  # (tb, V)
    lhs = jnp.concatenate(parts, axis=1)                              # (tb, C+D*V)

    # Single block-diagonal MXU matmul performs both the per-feature
    # Linear(1, E) and the embedding gather; bias is zero over discrete cols.
    out = jnp.dot(lhs, mbd_ref[...],
                  preferred_element_type=jnp.float32) + bias_ref[...]
    out_ref[...] = out.astype(out_ref.dtype)                          # one full-lane store


@functools.partial(jax.jit, static_argnames=("block_b", "out_dtype"))
def input_embed(x_cont, x_disc, w, bias, table, disc_min=0, *,
                block_b=1024, out_dtype=jnp.float32):
    """Fused forward of `Input` for a set of continuous + discrete features.

    x_cont: (B, C) float  -- C continuous scalar features
    x_disc: (B, D) int    -- D discrete features (raw, before subtracting min)
    w, bias: (C, EMBED)   -- packed Linear(1, EMBED) params (weight[:, 0])
    table:  (V, EMBED)    -- embedding table
    returns (B, C + D, EMBED) in `out_dtype`
    """
    B, C = x_cont.shape
    _, D = x_disc.shape
    V, E = table.shape
    CE, DE = C * E, D * E
    f32 = jnp.float32

    # ---- one-time XLA prep (outside the kernel): block-diagonal MXU operands
    w_bd = (jnp.eye(C, dtype=f32)[:, :, None] *
            w.astype(f32)[:, None, :]).reshape(C, CE)                 # (C, C*E)
    tab_bd = (jnp.eye(D, dtype=f32)[:, None, :, None] *
              table.astype(f32)[None, :, None, :]).reshape(D * V, DE)  # (D*V, D*E)
    m_bd = jnp.zeros((C + D * V, CE + DE), dtype=f32)
    m_bd = m_bd.at[:C, :CE].set(w_bd).at[C:, CE:].set(tab_bd)
    bias_full = jnp.concatenate(
        [bias.reshape(1, CE).astype(f32), jnp.zeros((1, DE), f32)], axis=1)

    # ---- batch tile: as large as possible (amortizes ~0.35us/grid-step),
    # rows a multiple of 8 (16 for 16-bit outputs) so stores stay packed.
    row_mult = 16 if jnp.dtype(out_dtype).itemsize == 2 else 8
    if B <= row_mult:
        bb = B
    else:
        bb = max(row_mult, (min(block_b, B) // row_mult) * row_mult)
    grid = (pl.cdiv(B, bb),)            # ragged last block handled by Pallas

    dmin = jnp.reshape(jnp.asarray(disc_min, jnp.int32), (1,))

    kernel = functools.partial(_input_embed_kernel, vocab=V)

    out_flat = pl.pallas_call(
        kernel,
        out_shape=jax.ShapeDtypeStruct((B, CE + DE), out_dtype),
        grid_spec=pltpu.PrefetchScalarGridSpec(
            num_scalar_prefetch=1,      # disc_min -> SMEM scalar
            grid=grid,
            in_specs=[
                pl.BlockSpec((bb, C), lambda i, dmin: (i, 0)),             # cont feats
                pl.BlockSpec((bb, D), lambda i, dmin: (i, 0)),             # disc indices
                pl.BlockSpec((C + D * V, CE + DE), lambda i, dmin: (0, 0)),  # block-diag W/table
                pl.BlockSpec((1, CE + DE), lambda i, dmin: (0, 0)),        # bias (0 on disc cols)
            ],
            out_specs=pl.BlockSpec((bb, CE + DE), lambda i, dmin: (i, 0)),
        ),
        # Batch axis is embarrassingly parallel -> shards across TCs on v7x.
        compiler_params=pltpu.CompilerParams(
            dimension_semantics=("parallel",)),
    )(dmin, x_cont.astype(f32), x_disc.astype(jnp.int32), m_bd, bias_full)

    # Contiguous (free) reshape back to tokens-by-embed.
    return out_flat.reshape(B, C + D, E)


def _reference(x_cont, x_disc, w, bias, table, disc_min=0):
    cont = x_cont[:, :, None] * w[None, :, :] + bias[None, :, :]
    disc = table[x_disc - disc_min]
    return jnp.concatenate([cont, disc], axis=-2)


if __name__ == "__main__":
    # Small shapes consistent with the module's forward.
    B = 200        # flattened batch dims (deliberately not tile-aligned -> ragged block)
    C = 4          # continuous scalar features
    D = 4          # discrete features
    V = 16         # discrete vocab size (var.range)
    EMBED = 32     # config.EMBED
    DISC_MIN = 2   # var.min (nonzero to exercise the offset subtraction)

    key = jax.random.PRNGKey(0)
    k1, k2, k3, k4, k5 = jax.random.split(key, 5)

    # Round float params/inputs to bf16-representable values so the comparison
    # below is exact no matter how many bf16 passes the MXU uses for f32 matmul.
    def bf16_round(x):
        return x.astype(jnp.bfloat16).astype(jnp.float32)

    w = bf16_round(jax.random.normal(k1, (C, EMBED), jnp.float32) * 0.1)
    bias = bf16_round(jax.random.normal(k2, (C, EMBED), jnp.float32) * 0.1)
    table = bf16_round(jax.random.normal(k3, (V, EMBED), jnp.float32) * 0.1)
    x_cont = bf16_round(jax.random.normal(k4, (B, C), jnp.float32))
    x_disc = jax.random.randint(k5, (B, D), DISC_MIN, DISC_MIN + V,
                                dtype=jnp.int32)

    # block_b=128 -> grid of 2 "parallel" steps with a ragged last block of
    # 72 valid rows (exercises the no-pad path). Production sizes should keep
    # the default block_b=1024.
    out = input_embed(x_cont, x_disc, w, bias, table, DISC_MIN, block_b=128)
    out = jax.block_until_ready(out)

    ref = _reference(x_cont, x_disc, w, bias, table, DISC_MIN)
    assert out.shape == (B, C + D, EMBED)
    err = float(jnp.abs(out - ref).max())
    assert jnp.allclose(out, ref, atol=1e-5, rtol=1e-5), err

    print("KERNEL_OK")
</pallas_src>

<mosaic_0001>
module attributes {stable_mosaic.version = 11 : i64} {
  func.func @_input_embed_kernel(%arg0: i32, %arg1: memref<1xi32, #tpu.memory_space<smem>>, %arg2: memref<128x4xf32, #tpu.memory_space<vmem>>, %arg3: memref<128x4xi32, #tpu.memory_space<vmem>>, %arg4: memref<68x256xf32, #tpu.memory_space<vmem>>, %arg5: memref<1x256xf32, #tpu.memory_space<vmem>>, %arg6: memref<128x256xf32, #tpu.memory_space<vmem>>) attributes {dimension_semantics = [#tpu.dimension_semantics<parallel>], iteration_bounds = array<i64: 2>, scalar_prefetch = 1 : i64, scratch_operands = 0 : i64, tpu.core_type = #tpu.core_type<tc>, window_params = [{transform_indices = @transform_0, window_bounds = array<i64: 128, 4>}, {transform_indices = @transform_1, window_bounds = array<i64: 128, 4>}, {pipeline_mode = #tpu.pipeline_mode<synchronous>, transform_indices = @transform_2, window_bounds = array<i64: 68, 256>}, {pipeline_mode = #tpu.pipeline_mode<synchronous>, transform_indices = @transform_3, window_bounds = array<i64: 1, 256>}, {transform_indices = @transform_4, window_bounds = array<i64: 128, 256>}]} {
    %c0 = arith.constant 0 : index
    %c0_0 = arith.constant 0 : index
    %0 = vector.load %arg3[%c0, %c0_0] : memref<128x4xi32, #tpu.memory_space<vmem>>, vector<128x4xi32>
    %c0_1 = arith.constant 0 : index
    %1 = memref.load %arg1[%c0_1] : memref<1xi32, #tpu.memory_space<smem>>
    %2 = vector.broadcast %1 : i32 to vector<128x4xi32>
    %3 = arith.subi %0, %2 : vector<128x4xi32>
    %4 = tpu.iota {dimensions = array<i32: 1>} : vector<128x16xi32>
    %c0_2 = arith.constant 0 : index
    %c0_3 = arith.constant 0 : index
    %5 = vector.load %arg2[%c0_2, %c0_3] : memref<128x4xf32, #tpu.memory_space<vmem>>, vector<128x4xf32>
    %6 = vector.extract_strided_slice %3 {offsets = [0, 0], sizes = [128, 1], strides = [1, 1]} : vector<128x4xi32> to vector<128x1xi32>
    %7 = vector.broadcast %6 : vector<128x1xi32> to vector<128x16xi32>
    %8 = arith.cmpi eq, %7, %4 : vector<128x16xi32>
    %9 = arith.extui %8 : vector<128x16xi1> to vector<128x16xi32>
    %10 = arith.sitofp %9 : vector<128x16xi32> to vector<128x16xf32>
    %11 = vector.extract_strided_slice %3 {offsets = [0, 1], sizes = [128, 1], strides = [1, 1]} : vector<128x4xi32> to vector<128x1xi32>
    %12 = vector.broadcast %11 : vector<128x1xi32> to vector<128x16xi32>
    %13 = arith.cmpi eq, %12, %4 : vector<128x16xi32>
    %14 = arith.extui %13 : vector<128x16xi1> to vector<128x16xi32>
    %15 = arith.sitofp %14 : vector<128x16xi32> to vector<128x16xf32>
    %16 = vector.extract_strided_slice %3 {offsets = [0, 2], sizes = [128, 1], strides = [1, 1]} : vector<128x4xi32> to vector<128x1xi32>
    %17 = vector.broadcast %16 : vector<128x1xi32> to vector<128x16xi32>
    %18 = arith.cmpi eq, %17, %4 : vector<128x16xi32>
    %19 = arith.extui %18 : vector<128x16xi1> to vector<128x16xi32>
    %20 = arith.sitofp %19 : vector<128x16xi32> to vector<128x16xf32>
    %21 = vector.extract_strided_slice %3 {offsets = [0, 3], sizes = [128, 1], strides = [1, 1]} : vector<128x4xi32> to vector<128x1xi32>
    %22 = vector.broadcast %21 : vector<128x1xi32> to vector<128x16xi32>
    %23 = arith.cmpi eq, %22, %4 : vector<128x16xi32>
    %24 = arith.extui %23 : vector<128x16xi1> to vector<128x16xi32>
    %25 = arith.sitofp %24 : vector<128x16xi32> to vector<128x16xf32>
    %26 = tpu.concatenate %5, %10, %15, %20, %25 in 1 : vector<128x4xf32>, vector<128x16xf32>, vector<128x16xf32>, vector<128x16xf32>, vector<128x16xf32> -> vector<128x68xf32>
    %c0_4 = arith.constant 0 : index
    %c0_5 = arith.constant 0 : index
    %27 = vector.load %arg4[%c0_4, %c0_5] : memref<68x256xf32, #tpu.memory_space<vmem>>, vector<68x256xf32>
    %cst = arith.constant dense<0.000000e+00> : vector<128x256xf32>
    %28 = tpu.matmul %26, %27, %cst {dimension_numbers = #tpu.dot_dimension_numbers<[1], [0], [0], [1], [0, 0, 1, 1], [], []>} : vector<128x68xf32>, vector<68x256xf32>, vector<128x256xf32> -> vector<128x256xf32>
    %c0_6 = arith.constant 0 : index
    %c0_7 = arith.constant 0 : index
    %29 = vector.load %arg5[%c0_6, %c0_7] : memref<1x256xf32, #tpu.memory_space<vmem>>, vector<1x256xf32>
    %30 = vector.broadcast %29 : vector<1x256xf32> to vector<128x256xf32>
    %31 = arith.addf %28, %30 : vector<128x256xf32>
    %c0_8 = arith.constant 0 : index
    %c0_9 = arith.constant 0 : index
    %32 = vector.load %arg6[%c0_8, %c0_9] : memref<128x256xf32, #tpu.memory_space<vmem>>, vector<128x256xf32>
    tpu.vector_store %arg6[%c0_8, %c0_9], %31 {strides = array<i32>} : memref<128x256xf32, #tpu.memory_space<vmem>>, vector<128x256xf32>,
    return
  }
  func.func @transform_0(%arg0: i32, %arg1: memref<1xi32, #tpu.memory_space<smem>>) -> (i32, i32) {
    %c0_i32 = arith.constant 0 : i32
    %c0_i32_0 = arith.constant 0 : i32
    return %arg0, %c0_i32 : i32, i32
  }
  func.func @transform_1(%arg0: i32, %arg1: memref<1xi32, #tpu.memory_space<smem>>) -> (i32, i32) {
    %c0_i32 = arith.constant 0 : i32
    %c0_i32_0 = arith.constant 0 : i32
    return %arg0, %c0_i32 : i32, i32
  }
  func.func @transform_2(%arg0: i32, %arg1: memref<1xi32, #tpu.memory_space<smem>>) -> (i32, i32) {
    %c0_i32 = arith.constant 0 : i32
    %c0_i32_0 = arith.constant 0 : i32
    %c0_i32_1 = arith.constant 0 : i32
    return %c0_i32, %c0_i32_0 : i32, i32
  }
  func.func @transform_3(%arg0: i32, %arg1: memref<1xi32, #tpu.memory_space<smem>>) -> (i32, i32) {
    %c0_i32 = arith.constant 0 : i32
    %c0_i32_0 = arith.constant 0 : i32
    %c0_i32_1 = arith.constant 0 : i32
    return %c0_i32, %c0_i32_0 : i32, i32
  }
  func.func @transform_4(%arg0: i32, %arg1: memref<1xi32, #tpu.memory_space<smem>>) -> (i32, i32) {
    %c0_i32 = arith.constant 0 : i32
    %c0_i32_0 = arith.constant 0 : i32
    return %arg0, %c0_i32 : i32, i32
  }
}

</mosaic_0001>

<llo_original>
// kernel: input_embed.1
$region0: #{input_embed.1}
  #allocation0 [shape = 'u32[]', space=smem, size = 0x4, offset = 0x4, fixed_abs, tag = 'smem constant byte address 0x4 - core index']
  #allocation1 [shape = 'u32[144,128]{1,0:T(1,128)}', space=vmem, size = 0x12000, scoped, tag = 'internal scratch']
  #allocation2 [shape = 's32[1]{0}', space=sflag, size = 0x4, scoped, tag = 'scoped memory for input_embed.1']
  #allocation3 [shape = 's32[1]{0:T(128)S(6)}', space=smem, size = 0x200, scoped, tag = 'prefetched SMEM operand 0']
  %s0 = inlined_call_operand.<no memory space> [shape: s32[1], index: 0, kind: input, shape index: {}]
  %s1 = inlined_call_operand.vmem [shape: f32[200,4], index: 1, kind: input, shape index: {}]
  %s2 = inlined_call_operand.vmem [shape: s32[200,4], index: 2, kind: input, shape index: {}]
  %s3 = inlined_call_operand.vmem [shape: f32[68,256], index: 3, kind: input, shape index: {}]
  %s4 = inlined_call_operand.vmem [shape: f32[1,256], index: 4, kind: input, shape index: {}]
  %s5 = inlined_call_operand.vmem [shape: f32[200,256], index: 5, kind: output, shape index: {}]
  %s6 = sld [smem:[#allocation0]]
  $region75: #{input_embed.1} parent=0
    _
  %s8 = ssub.s32 1, %s6
  %s9 = scalar_select 0, %s8, %s6
  %10 = sst [smem:[#allocation3]] %s0
  $region1: #{input_embed.1} parent=0
    #allocation4 [shape = 'u8[262144]{0}', space=vmem, size = 0x40000, scoped, tag = 'output window, operand 0']
    loop: start=0, step=1, limit=4
    $region2: #{input_embed.1} parent=1 // loop_pre_header
      _
    $region3: #{input_embed.1} parent=1 // loop_header
      %s12 = sphi 0, %s16
      %p13 = scmp.ge.s32.totalorder %s12, 4
      %s22 = sphi 0, %s24
      %s25 = sphi 0, %s22
      %s26 = sphi 0, %s25
      %s42 = sphi 0, %s26
      %s48 = sphi 0, %s50
      %s51 = sphi 0, %s48
      %s52 = sphi 0, %s51
      %s68 = sphi 0, %s52
      %s72 = sphi 0, %s72
      %s74 = sphi 0, %s72
      %s75 = sphi 0, %s74
      %s89 = sphi 0, %s75
      %s93 = sphi 0, %s93
      %s95 = sphi 0, %s93
      %s96 = sphi 0, %s95
      %s110 = sphi 0, %s96
      %s116 = sphi 0, %s118
      %s119 = sphi 0, %s116
      %s120 = sphi 0, %s119
      %s136 = sphi 0, %s120
    $region4: #{input_embed.1} parent=1 // loop_header_branch
      %15 = sbr.rel (%p13) target = $region8
    $region5: #{input_embed.1} parent=1 // loop_body
      %s17 = ssub.s32 %s12, 1
      %s18 = ssub.s32 %s12, 2
      %s19 = sadd.s32 %s12, 1
      %s20 = ssub.s32 %s12, %s19
      %p21 = scmp.eq.s32.totalorder %s20, 0
      %s23 = sadd.s32 %s22, 1
      %s24 = scalar_select %p21, %s22, %s23
      %p27 = pneg %p21
      %p28 = scmp.eq.s32.totalorder %s12, 1
      %p29 = por %p27, %p28
      %p30 = scmp.ne.s32.totalorder %s22, %s25
      %p31 = scmp.eq.s32.totalorder %s12, 0
      %p32 = por %p30, %p31
      %p33 = scmp.ne.s32.totalorder %s22, %s25
      %p34 = scmp.eq.s32.totalorder %s17, 1
      %p35 = por %p33, %p34
      %p36 = scmp.ne.s32.totalorder %s25, %s26
      %p37 = scmp.eq.s32.totalorder %s17, 0
      %p38 = por %p36, %p37
      %p39 = scmp.ne.s32.totalorder %s25, %s26
      %p40 = scmp.eq.s32.totalorder %s18, 1
      %p41 = por %p39, %p40
      %p43 = scmp.ne.s32.totalorder %s26, %s42
      %p44 = scmp.eq.s32.totalorder %s18, 0
      %p45 = por %p43, %p44
      %s46 = ssub.s32 %s12, %s19
      %p47 = scmp.eq.s32.totalorder %s46, 0
      %s49 = sadd.s32 %s48, 1
      %s50 = scalar_select %p47, %s48, %s49
      %p53 = pneg %p47
      %p54 = scmp.eq.s32.totalorder %s12, 1
      %p55 = por %p53, %p54
      %p56 = scmp.ne.s32.totalorder %s48, %s51
      %p57 = scmp.eq.s32.totalorder %s12, 0
      %p58 = por %p56, %p57
      %p59 = scmp.ne.s32.totalorder %s48, %s51
      %p60 = scmp.eq.s32.totalorder %s17, 1
      %p61 = por %p59, %p60
      %p62 = scmp.ne.s32.totalorder %s51, %s52
      %p63 = scmp.eq.s32.totalorder %s17, 0
      %p64 = por %p62, %p63
      %p65 = scmp.ne.s32.totalorder %s51, %s52
      %p66 = scmp.eq.s32.totalorder %s18, 1
      %p67 = por %p65, %p66
      %p69 = scmp.ne.s32.totalorder %s52, %s68
      %p70 = scmp.eq.s32.totalorder %s18, 0
      %p71 = por %p69, %p70
      %s73 = sadd.s32 %s72, 1
      %p76 = scmp.eq.s32.totalorder %s12, 1
      %p77 = scmp.ne.s32.totalorder %s72, %s74
      %p78 = scmp.eq.s32.totalorder %s12, 0
      %p79 = por %p77, %p78
      %p80 = scmp.ne.s32.totalorder %s72, %s74
      %p81 = scmp.eq.s32.totalorder %s17, 1
      %p82 = por %p80, %p81
      %p83 = scmp.ne.s32.totalorder %s74, %s75
      %p84 = scmp.eq.s32.totalorder %s17, 0
      %p85 = por %p83, %p84
      %p86 = scmp.ne.s32.totalorder %s74, %s75
      %p87 = scmp.eq.s32.totalorder %s18, 1
      %p88 = por %p86, %p87
      %p90 = scmp.ne.s32.totalorder %s75, %s89
      %p91 = scmp.eq.s32.totalorder %s18, 0
      %p92 = por %p90, %p91
      %s94 = sadd.s32 %s93, 1
      %p97 = scmp.eq.s32.totalorder %s12, 1
      %p98 = scmp.ne.s32.totalorder %s93, %s95
      %p99 = scmp.eq.s32.totalorder %s12, 0
      %p100 = por %p98, %p99
      %p101 = scmp.ne.s32.totalorder %s93, %s95
      %p102 = scmp.eq.s32.totalorder %s17, 1
      %p103 = por %p101, %p102
      %p104 = scmp.ne.s32.totalorder %s95, %s96
      %p105 = scmp.eq.s32.totalorder %s17, 0
      %p106 = por %p104, %p105
      %p107 = scmp.ne.s32.totalorder %s95, %s96
      %p108 = scmp.eq.s32.totalorder %s18, 1
      %p109 = por %p107, %p108
      %p111 = scmp.ne.s32.totalorder %s96, %s110
      %p112 = scmp.eq.s32.totalorder %s18, 0
      %p113 = por %p111, %p112
      %s114 = ssub.s32 %s12, %s19
      %p115 = scmp.eq.s32.totalorder %s114, 0
      %s117 = sadd.s32 %s116, 1
      %s118 = scalar_select %p115, %s116, %s117
      %p121 = pneg %p115
      %p122 = scmp.eq.s32.totalorder %s12, 1
      %p123 = por %p121, %p122
      %p124 = scmp.ne.s32.totalorder %s116, %s119
      %p125 = scmp.eq.s32.totalorder %s12, 0
      %p126 = por %p124, %p125
      %p127 = scmp.ne.s32.totalorder %s116, %s119
      %p128 = scmp.eq.s32.totalorder %s17, 1
      %p129 = por %p127, %p128
      %p130 = scmp.ne.s32.totalorder %s119, %s120
      %p131 = scmp.eq.s32.totalorder %s17, 0
      %p132 = por %p130, %p131
      %p133 = scmp.ne.s32.totalorder %s119, %s120
      %p134 = scmp.eq.s32.totalorder %s18, 1
      %p135 = por %p133, %p134
      %p137 = scmp.ne.s32.totalorder %s120, %s136
      %p138 = scmp.eq.s32.totalorder %s18, 0
      %p139 = por %p137, %p138
      %p140 = scmp.le.s32.totalorder 1, %s12
      %p141 = scmp.lt.s32.totalorder %s12, 3
      %p142 = pnand %p140, %p141
      %p143 = pneg %p142
      // Predicated region
      $region9: #{input_embed.1} parent=5 // pred_check
        _
      $region10: #{input_embed.1} parent=5 // pred_check_branch
        %145 = sbr.rel (%p142) target = $region12
      $region11: #{input_embed.1} parent=5 // pred_region
        %s146 = ssub.s32 %s12, 1
        // Predicated region
        $region13: #{input_embed.1} parent=11 // pred_check
          %p147 = pneg %p85
        $region14: #{input_embed.1} parent=11 // pred_check_branch
          %149 = sbr.rel (%p147) target = $region16
        $region15: #{input_embed.1} parent=11 // pred_region
          _
        $region16: #{input_embed.1} parent=11 // pred_fallthru
          _
        // Predicated region
        $region17: #{input_embed.1} parent=11 // pred_check
          %p150 = pneg %p106
        $region18: #{input_embed.1} parent=11 // pred_check_branch
          %152 = sbr.rel (%p150) target = $region20
        $region19: #{input_embed.1} parent=11 // pred_region
          _
        $region20: #{input_embed.1} parent=11 // pred_fallthru
          _
      $region12: #{input_embed.1} parent=5 // pred_fallthru
        _
      %p153 = scmp.lt.s32.totalorder %s12, 2
      // Predicated region
      $region21: #{input_embed.1} parent=5 // pred_check
        %p154 = pneg %p153
      $region22: #{input_embed.1} parent=5 // pred_check_branch
        %156 = sbr.rel (%p154) target = $region24
      $region23: #{input_embed.1} parent=5 // pred_region
        // Predicated region
        $region25: #{input_embed.1} parent=23 // pred_check
          %p157 = pneg %p32
        $region26: #{input_embed.1} parent=23 // pred_check_branch
          %159 = sbr.rel (%p157) target = $region28
        $region27: #{input_embed.1} parent=23 // pred_region
          %s160 = smul.u32 16, %s12
          %s161 = ssub.s32 25, %s160
          %p162 = scmp.lt.s32.totalorder %s161, 16
          %s163 = scalar_select %p162, %s161, 16
          %s164 = smul.u32 128, %s163
          %p165 = scmp.lt.s32.totalorder %s160, 24
          %s166 = scalar_select %p165, %s160, 24
          %s167 = smul.addr %s166, 8
          %s168 = scalar_lea.vmem %s1, %s167
          %s169 = smul.u32 16, %s12
          %s170 = ssub.s32 25, %s169
          %p171 = scmp.lt.s32.totalorder %s170, 16
          %s172 = scalar_select %p171, %s170, 16
          %s173 = smul.u32 128, %s172
        $region28: #{input_embed.1} parent=23 // pred_fallthru
          _
        // Predicated region
        $region29: #{input_embed.1} parent=23 // pred_check
          %p174 = pneg %p58
        $region30: #{input_embed.1} parent=23 // pred_check_branch
          %176 = sbr.rel (%p174) target = $region32
        $region31: #{input_embed.1} parent=23 // pred_region
          %s177 = smul.u32 16, %s12
          %s178 = ssub.s32 25, %s177
          %p179 = scmp.lt.s32.totalorder %s178, 16
          %s180 = scalar_select %p179, %s178, 16
          %s181 = smul.u32 128, %s180
          %p182 = scmp.lt.s32.totalorder %s177, 24
          %s183 = scalar_select %p182, %s177, 24
          %s184 = smul.addr %s183, 8
          %s185 = scalar_lea.vmem %s2, %s184
          %s186 = smul.u32 16, %s12
          %s187 = ssub.s32 25, %s186
          %p188 = scmp.lt.s32.totalorder %s187, 16
          %s189 = scalar_select %p188, %s187, 16
          %s190 = smul.u32 128, %s189
        $region32: #{input_embed.1} parent=23 // pred_fallthru
          _
      $region24: #{input_embed.1} parent=5 // pred_fallthru
        _
      %p191 = scmp.le.s32.totalorder 1, %s12
      %p192 = scmp.lt.s32.totalorder %s12, 3
      %p193 = pnand %p191, %p192
      %p194 = pneg %p193
      // Predicated region
      $region33: #{input_embed.1} parent=5 // pred_check
        _
      $region34: #{input_embed.1} parent=5 // pred_check_branch
        %196 = sbr.rel (%p193) target = $region36
      $region35: #{input_embed.1} parent=5 // pred_region
        %s197 = ssub.s32 %s12, 1
        %s198 = smul.u32 16, %s17
        %s199 = ssub.s32 25, %s198
        %p200 = scmp.lt.s32.totalorder %s199, 16
        %s201 = scalar_select %p200, %s199, 16
        %s202 = smul.u32 128, %s201
        %p203 = scmp.lt.s32.totalorder %s198, 24
        %s204 = scalar_select %p203, %s198, 24
        %s205 = smul.addr %s204, 8
        %s206 = scalar_lea.vmem %s1, %s205
        %p207 = pneg %p38
        %p208 = pneg %p35
        %s209 = smul.u32 16, %s17
        %s210 = ssub.s32 25, %s209
        %p211 = scmp.lt.s32.totalorder %s210, 16
        %s212 = scalar_select %p211, %s210, 16
        %s213 = smul.u32 128, %s212
        %p214 = scmp.lt.s32.totalorder %s209, 24
        %s215 = scalar_select %p214, %s209, 24
        %s216 = smul.addr %s215, 8
        %s217 = scalar_lea.vmem %s2, %s216
        %p218 = pneg %p64
        %p219 = pneg %p61
        %p220 = pneg %p85
        %p221 = pneg %p82
        %p222 = pneg %p106
        %p223 = pneg %p103
        %p224 = pneg %p132
        %p225 = pneg %p129
        %s226 = sand.u32 %s119, 1
        %s227 = sand.u32 %s119, 1
        %s228 = smul.addr %s227, 256
        %s229 = scalar_lea.vmem [#allocation4], %s228
        %s230 = smul.u32 16, %s17
        %s231 = ssub.s32 25, %s230
        %p232 = scmp.lt.s32.totalorder %s231, 16
        %s233 = scalar_select %p232, %s231, 16
        %s234 = smul.u32 128, %s233
        %p235 = scmp.lt.s32.totalorder %s230, 24
        %s236 = scalar_select %p235, %s230, 24
        %s237 = smul.addr %s236, 8
        %s238 = scalar_lea.vmem %s1, %s237
        %s239 = smul.u32 16, %s17
        %s240 = ssub.s32 25, %s239
        %p241 = scmp.lt.s32.totalorder %s240, 16
        %s242 = scalar_select %p241, %s240, 16
        %s243 = smul.u32 128, %s242
        %s244 = smul.u32 16, %s17
        %s245 = ssub.s32 25, %s244
        %p246 = scmp.lt.s32.totalorder %s245, 16
        %s247 = scalar_select %p246, %s245, 16
        %s248 = smul.u32 128, %s247
        %p249 = scmp.lt.s32.totalorder %s244, 24
        %s250 = scalar_select %p249, %s244, 24
        %s251 = smul.addr %s250, 8
        %s252 = scalar_lea.vmem %s2, %s251
        %s253 = smul.u32 16, %s17
        %s254 = ssub.s32 25, %s253
        %p255 = scmp.lt.s32.totalorder %s254, 16
        %s256 = scalar_select %p255, %s254, 16
        %s257 = smul.u32 128, %s256
        %s258 = smul.u32 16, %s17
        %s259 = ssub.s32 25, %s258
        %p260 = scmp.lt.s32.totalorder %s259, 16
        %s261 = scalar_select %p260, %s259, 16
        %s262 = smul.u32 128, %s261
        %s263 = smul.u32 %s262, 2
        %v264 = vld [vmem:[%s252] sm:$0xff]
        %v265 = vld [vmem:[%s252 + $0x8] sm:$0xff]
        %v266 = vld [vmem:[%s252 + $0x10] sm:$0xff]
        %v267 = vld [vmem:[%s252 + $0x18] sm:$0xff]
        %v268 = vld [vmem:[%s252 + $0x20] sm:$0xff]
        %v269 = vld [vmem:[%s252 + $0x28] sm:$0xff]
        %v270 = vld [vmem:[%s252 + $0x30] sm:$0xff]
        %v271 = vld [vmem:[%s252 + $0x38] sm:$0xff]
        %v272 = vld [vmem:[%s252 + $0x40] sm:$0xff]
        %v273 = vld [vmem:[%s252 + $0x48] sm:$0xff]
        %v274 = vld [vmem:[%s252 + $0x50] sm:$0xff]
        %v275 = vld [vmem:[%s252 + $0x58] sm:$0xff]
        %v276 = vld [vmem:[%s252 + $0x60] sm:$0xff]
        %v277 = vld [vmem:[%s252 + $0x68] sm:$0xff]
        %v278 = vld [vmem:[%s252 + $0x70] sm:$0xff]
        %v279 = vld [vmem:[%s252 + $0x78] sm:$0xff]
        %s280 = sld [smem:[#allocation3]]
        %v281 = vstv %s280
        %v282 = vsub.s32 %v264, %v281
        %v283 = vsub.s32 %v265, %v281
        %v284 = vsub.s32 %v266, %v281
        %v285 = vsub.s32 %v267, %v281
        %v286 = vsub.s32 %v268, %v281
        %v287 = vsub.s32 %v269, %v281
        %v288 = vsub.s32 %v270, %v281
        %v289 = vsub.s32 %v271, %v281
        %v290 = vsub.s32 %v272, %v281
        %v291 = vsub.s32 %v273, %v281
        %v292 = vsub.s32 %v274, %v281
        %v293 = vsub.s32 %v275, %v281
        %v294 = vsub.s32 %v276, %v281
        %v295 = vsub.s32 %v277, %v281
        %v296 = vsub.s32 %v278, %v281
        %v297 = vsub.s32 %v279, %v281
        %v298 = vlaneseq
        %v299 = vand.u32 %v298, 127
        %v300 = vld [vmem:[%s238] sm:$0xff]
        %v301 = vld [vmem:[%s238 + $0x8] sm:$0xff]
        %v302 = vld [vmem:[%s238 + $0x10] sm:$0xff]
        %v303 = vld [vmem:[%s238 + $0x18] sm:$0xff]
        %v304 = vld [vmem:[%s238 + $0x20] sm:$0xff]
        %v305 = vld [vmem:[%s238 + $0x28] sm:$0xff]
        %v306 = vld [vmem:[%s238 + $0x30] sm:$0xff]
        %v307 = vld [vmem:[%s238 + $0x38] sm:$0xff]
        %v308 = vld [vmem:[%s238 + $0x40] sm:$0xff]
        %v309 = vld [vmem:[%s238 + $0x48] sm:$0xff]
        %v310 = vld [vmem:[%s238 + $0x50] sm:$0xff]
        %v311 = vld [vmem:[%s238 + $0x58] sm:$0xff]
        %v312 = vld [vmem:[%s238 + $0x60] sm:$0xff]
        %v313 = vld [vmem:[%s238 + $0x68] sm:$0xff]
        %v314 = vld [vmem:[%s238 + $0x70] sm:$0xff]
        %v315 = vld [vmem:[%s238 + $0x78] sm:$0xff]
        %316 = vset.pattern.permute.xlu0 0
        %317 = vperm.xlu0 %316, %v282
        %v318 = vpop.permute.xlu0 %317
        %319 = vset.pattern.permute.xlu0 0
        %320 = vperm.xlu0 %319, %v283
        %v321 = vpop.permute.xlu0 %320
        %322 = vset.pattern.permute.xlu0 0
        %323 = vperm.xlu0 %322, %v284
        %v324 = vpop.permute.xlu0 %323
        %325 = vset.pattern.permute.xlu0 0
        %326 = vperm.xlu0 %325, %v285
        %v327 = vpop.permute.xlu0 %326
        %328 = vset.pattern.permute.xlu0 0
        %329 = vperm.xlu0 %328, %v286
        %v330 = vpop.permute.xlu0 %329
        %331 = vset.pattern.permute.xlu0 0
        %332 = vperm.xlu0 %331, %v287
        %v333 = vpop.permute.xlu0 %332
        %334 = vset.pattern.permute.xlu0 0
        %335 = vperm.xlu0 %334, %v288
        %v336 = vpop.permute.xlu0 %335
        %337 = vset.pattern.permute.xlu0 0
        %338 = vperm.xlu0 %337, %v289
        %v339 = vpop.permute.xlu0 %338
        %340 = vset.pattern.permute.xlu0 0
        %341 = vperm.xlu0 %340, %v290
        %v342 = vpop.permute.xlu0 %341
        %343 = vset.pattern.permute.xlu0 0
        %344 = vperm.xlu0 %343, %v291
        %v345 = vpop.permute.xlu0 %344
        %346 = vset.pattern.permute.xlu0 0
        %347 = vperm.xlu0 %346, %v292
        %v348 = vpop.permute.xlu0 %347
        %349 = vset.pattern.permute.xlu0 0
        %350 = vperm.xlu0 %349, %v293
        %v351 = vpop.permute.xlu0 %350
        %352 = vset.pattern.permute.xlu0 0
        %353 = vperm.xlu0 %352, %v294
        %v354 = vpop.permute.xlu0 %353
        %355 = vset.pattern.permute.xlu0 0
        %356 = vperm.xlu0 %355, %v295
        %v357 = vpop.permute.xlu0 %356
        %358 = vset.pattern.permute.xlu0 0
        %359 = vperm.xlu0 %358, %v296
        %v360 = vpop.permute.xlu0 %359
        %361 = vset.pattern.permute.xlu0 0
        %362 = vperm.xlu0 %361, %v297
        %v363 = vpop.permute.xlu0 %362
        %vm364 = vcmp.eq.s32.totalorder %v318, %v299
        %vm365 = vcmp.eq.s32.totalorder %v321, %v299
        %vm366 = vcmp.eq.s32.totalorder %v324, %v299
        %vm367 = vcmp.eq.s32.totalorder %v327, %v299
        %vm368 = vcmp.eq.s32.totalorder %v330, %v299
        %vm369 = vcmp.eq.s32.totalorder %v333, %v299
        %vm370 = vcmp.eq.s32.totalorder %v336, %v299
        %vm371 = vcmp.eq.s32.totalorder %v339, %v299
        %vm372 = vcmp.eq.s32.totalorder %v342, %v299
        %vm373 = vcmp.eq.s32.totalorder %v345, %v299
        %vm374 = vcmp.eq.s32.totalorder %v348, %v299
        %vm375 = vcmp.eq.s32.totalorder %v351, %v299
        %vm376 = vcmp.eq.s32.totalorder %v354, %v299
        %vm377 = vcmp.eq.s32.totalorder %v357, %v299
        %vm378 = vcmp.eq.s32.totalorder %v360, %v299
        %vm379 = vcmp.eq.s32.totalorder %v363, %v299
        %v380 = vsel %vm364, 1, 0
        %v381 = vsel %vm365, 1, 0
        %v382 = vsel %vm366, 1, 0
        %v383 = vsel %vm367, 1, 0
        %v384 = vsel %vm368, 1, 0
        %v385 = vsel %vm369, 1, 0
        %v386 = vsel %vm370, 1, 0
        %v387 = vsel %vm371, 1, 0
        %v388 = vsel %vm372, 1, 0
        %v389 = vsel %vm373, 1, 0
        %v390 = vsel %vm374, 1, 0
        %v391 = vsel %vm375, 1, 0
        %v392 = vsel %vm376, 1, 0
        %v393 = vsel %vm377, 1, 0
        %v394 = vsel %vm378, 1, 0
        %v395 = vsel %vm379, 1, 0
        %v396 = vcvt.s32.f32 %v380
        %v397 = vcvt.s32.f32 %v381
        %v398 = vcvt.s32.f32 %v382
        %v399 = vcvt.s32.f32 %v383
        %v400 = vcvt.s32.f32 %v384
        %v401 = vcvt.s32.f32 %v385
        %v402 = vcvt.s32.f32 %v386
        %v403 = vcvt.s32.f32 %v387
        %v404 = vcvt.s32.f32 %v388
        %v405 = vcvt.s32.f32 %v389
        %v406 = vcvt.s32.f32 %v390
        %v407 = vcvt.s32.f32 %v391
        %v408 = vcvt.s32.f32 %v392
        %v409 = vcvt.s32.f32 %v393
        %v410 = vcvt.s32.f32 %v394
        %v411 = vcvt.s32.f32 %v395
        %412 = vset.pattern.permute.xlu0 1
        %413 = vperm.xlu0 %412, %v282
        %v414 = vpop.permute.xlu0 %413
        %415 = vset.pattern.permute.xlu0 1
        %416 = vperm.xlu0 %415, %v283
        %v417 = vpop.permute.xlu0 %416
        %418 = vset.pattern.permute.xlu0 1
        %419 = vperm.xlu0 %418, %v284
        %v420 = vpop.permute.xlu0 %419
        %421 = vset.pattern.permute.xlu0 1
        %422 = vperm.xlu0 %421, %v285
        %v423 = vpop.permute.xlu0 %422
        %424 = vset.pattern.permute.xlu0 1
        %425 = vperm.xlu0 %424, %v286
        %v426 = vpop.permute.xlu0 %425
        %427 = vset.pattern.permute.xlu0 1
        %428 = vperm.xlu0 %427, %v287
        %v429 = vpop.permute.xlu0 %428
        %430 = vset.pattern.permute.xlu0 1
        %431 = vperm.xlu0 %430, %v288
        %v432 = vpop.permute.xlu0 %431
        %433 = vset.pattern.permute.xlu0 1
        %434 = vperm.xlu0 %433, %v289
        %v435 = vpop.permute.xlu0 %434
        %436 = vset.pattern.permute.xlu0 1
        %437 = vperm.xlu0 %436, %v290
        %v438 = vpop.permute.xlu0 %437
        %439 = vset.pattern.permute.xlu0 1
        %440 = vperm.xlu0 %439, %v291
        %v441 = vpop.permute.xlu0 %440
        %442 = vset.pattern.permute.xlu0 1
        %443 = vperm.xlu0 %442, %v292
        %v444 = vpop.permute.xlu0 %443
        %445 = vset.pattern.permute.xlu0 1
        %446 = vperm.xlu0 %445, %v293
        %v447 = vpop.permute.xlu0 %446
        %448 = vset.pattern.permute.xlu0 1
        %449 = vperm.xlu0 %448, %v294
        %v450 = vpop.permute.xlu0 %449
        %451 = vset.pattern.permute.xlu0 1
        %452 = vperm.xlu0 %451, %v295
        %v453 = vpop.permute.xlu0 %452
        %454 = vset.pattern.permute.xlu0 1
        %455 = vperm.xlu0 %454, %v296
        %v456 = vpop.permute.xlu0 %455
        %457 = vset.pattern.permute.xlu0 1
        %458 = vperm.xlu0 %457, %v297
        %v459 = vpop.permute.xlu0 %458
        %vm460 = vcmp.eq.s32.totalorder %v414, %v299
        %vm461 = vcmp.eq.s32.totalorder %v417, %v299
        %vm462 = vcmp.eq.s32.totalorder %v420, %v299
        %vm463 = vcmp.eq.s32.totalorder %v423, %v299
        %vm464 = vcmp.eq.s32.totalorder %v426, %v299
        %vm465 = vcmp.eq.s32.totalorder %v429, %v299
        %vm466 = vcmp.eq.s32.totalorder %v432, %v299
        %vm467 = vcmp.eq.s32.totalorder %v435, %v299
        %vm468 = vcmp.eq.s32.totalorder %v438, %v299
        %vm469 = vcmp.eq.s32.totalorder %v441, %v299
        %vm470 = vcmp.eq.s32.totalorder %v444, %v299
        %vm471 = vcmp.eq.s32.totalorder %v447, %v299
        %vm472 = vcmp.eq.s32.totalorder %v450, %v299
        %vm473 = vcmp.eq.s32.totalorder %v453, %v299
        %vm474 = vcmp.eq.s32.totalorder %v456, %v299
        %vm475 = vcmp.eq.s32.totalorder %v459, %v299
        %v476 = vsel %vm460, 1, 0
        %v477 = vsel %vm461, 1, 0
        %v478 = vsel %vm462, 1, 0
        %v479 = vsel %vm463, 1, 0
        %v480 = vsel %vm464, 1, 0
        %v481 = vsel %vm465, 1, 0
        %v482 = vsel %vm466, 1, 0
        %v483 = vsel %vm467, 1, 0
        %v484 = vsel %vm468, 1, 0
        %v485 = vsel %vm469, 1, 0
        %v486 = vsel %vm470, 1, 0
        %v487 = vsel %vm471, 1, 0
        %v488 = vsel %vm472, 1, 0
        %v489 = vsel %vm473, 1, 0
        %v490 = vsel %vm474, 1, 0
        %v491 = vsel %vm475, 1, 0
        %v492 = vcvt.s32.f32 %v476
        %v493 = vcvt.s32.f32 %v477
        %v494 = vcvt.s32.f32 %v478
        %v495 = vcvt.s32.f32 %v479
        %v496 = vcvt.s32.f32 %v480
        %v497 = vcvt.s32.f32 %v481
        %v498 = vcvt.s32.f32 %v482
        %v499 = vcvt.s32.f32 %v483
        %v500 = vcvt.s32.f32 %v484
        %v501 = vcvt.s32.f32 %v485
        %v502 = vcvt.s32.f32 %v486
        %v503 = vcvt.s32.f32 %v487
        %v504 = vcvt.s32.f32 %v488
        %v505 = vcvt.s32.f32 %v489
        %v506 = vcvt.s32.f32 %v490
        %v507 = vcvt.s32.f32 %v491
        %508 = vset.pattern.permute.xlu0 2
        %509 = vperm.xlu0 %508, %v282
        %v510 = vpop.permute.xlu0 %509
        %511 = vset.pattern.permute.xlu0 2
        %512 = vperm.xlu0 %511, %v283
        %v513 = vpop.permute.xlu0 %512
        %514 = vset.pattern.permute.xlu0 2
        %515 = vperm.xlu0 %514, %v284
        %v516 = vpop.permute.xlu0 %515
        %517 = vset.pattern.permute.xlu0 2
        %518 = vperm.xlu0 %517, %v285
        %v519 = vpop.permute.xlu0 %518
        %520 = vset.pattern.permute.xlu0 2
        %521 = vperm.xlu0 %520, %v286
        %v522 = vpop.permute.xlu0 %521
        %523 = vset.pattern.permute.xlu0 2
        %524 = vperm.xlu0 %523, %v287
        %v525 = vpop.permute.xlu0 %524
        %526 = vset.pattern.permute.xlu0 2
        %527 = vperm.xlu0 %526, %v288
        %v528 = vpop.permute.xlu0 %527
        %529 = vset.pattern.permute.xlu0 2
        %530 = vperm.xlu0 %529, %v289
        %v531 = vpop.permute.xlu0 %530
        %532 = vset.pattern.permute.xlu0 2
        %533 = vperm.xlu0 %532, %v290
        %v534 = vpop.permute.xlu0 %533
        %535 = vset.pattern.permute.xlu0 2
        %536 = vperm.xlu0 %535, %v291
        %v537 = vpop.permute.xlu0 %536
        %538 = vset.pattern.permute.xlu0 2
        %539 = vperm.xlu0 %538, %v292
        %v540 = vpop.permute.xlu0 %539
        %541 = vset.pattern.permute.xlu0 2
        %542 = vperm.xlu0 %541, %v293
        %v543 = vpop.permute.xlu0 %542
        %544 = vset.pattern.permute.xlu0 2
        %545 = vperm.xlu0 %544, %v294
        %v546 = vpop.permute.xlu0 %545
        %547 = vset.pattern.permute.xlu0 2
        %548 = vperm.xlu0 %547, %v295
        %v549 = vpop.permute.xlu0 %548
        %550 = vset.pattern.permute.xlu0 2
        %551 = vperm.xlu0 %550, %v296
        %v552 = vpop.permute.xlu0 %551
        %553 = vset.pattern.permute.xlu0 2
        %554 = vperm.xlu0 %553, %v297
        %v555 = vpop.permute.xlu0 %554
        %vm556 = vcmp.eq.s32.totalorder %v510, %v299
        %vm557 = vcmp.eq.s32.totalorder %v513, %v299
        %vm558 = vcmp.eq.s32.totalorder %v516, %v299
        %vm559 = vcmp.eq.s32.totalorder %v519, %v299
        %vm560 = vcmp.eq.s32.totalorder %v522, %v299
        %vm561 = vcmp.eq.s32.totalorder %v525, %v299
        %vm562 = vcmp.eq.s32.totalorder %v528, %v299
        %vm563 = vcmp.eq.s32.totalorder %v531, %v299
        %vm564 = vcmp.eq.s32.totalorder %v534, %v299
        %vm565 = vcmp.eq.s32.totalorder %v537, %v299
        %vm566 = vcmp.eq.s32.totalorder %v540, %v299
        %vm567 = vcmp.eq.s32.totalorder %v543, %v299
        %vm568 = vcmp.eq.s32.totalorder %v546, %v299
        %vm569 = vcmp.eq.s32.totalorder %v549, %v299
        %vm570 = vcmp.eq.s32.totalorder %v552, %v299
        %vm571 = vcmp.eq.s32.totalorder %v555, %v299
        %v572 = vsel %vm556, 1, 0
        %v573 = vsel %vm557, 1, 0
        %v574 = vsel %vm558, 1, 0
        %v575 = vsel %vm559, 1, 0
        %v576 = vsel %vm560, 1, 0
        %v577 = vsel %vm561, 1, 0
        %v578 = vsel %vm562, 1, 0
        %v579 = vsel %vm563, 1, 0
        %v580 = vsel %vm564, 1, 0
        %v581 = vsel %vm565, 1, 0
        %v582 = vsel %vm566, 1, 0
        %v583 = vsel %vm567, 1, 0
        %v584 = vsel %vm568, 1, 0
        %v585 = vsel %vm569, 1, 0
        %v586 = vsel %vm570, 1, 0
        %v587 = vsel %vm571, 1, 0
        %v588 = vcvt.s32.f32 %v572
        %v589 = vcvt.s32.f32 %v573
        %v590 = vcvt.s32.f32 %v574
        %v591 = vcvt.s32.f32 %v575
        %v592 = vcvt.s32.f32 %v576
        %v593 = vcvt.s32.f32 %v577
        %v594 = vcvt.s32.f32 %v578
        %v595 = vcvt.s32.f32 %v579
        %v596 = vcvt.s32.f32 %v580
        %v597 = vcvt.s32.f32 %v581
        %v598 = vcvt.s32.f32 %v582
        %v599 = vcvt.s32.f32 %v583
        %v600 = vcvt.s32.f32 %v584
        %v601 = vcvt.s32.f32 %v585
        %v602 = vcvt.s32.f32 %v586
        %v603 = vcvt.s32.f32 %v587
        %604 = vset.pattern.permute.xlu0 3
        %605 = vperm.xlu0 %604, %v282
        %v606 = vpop.permute.xlu0 %605
        %607 = vset.pattern.permute.xlu0 3
        %608 = vperm.xlu0 %607, %v283
        %v609 = vpop.permute.xlu0 %608
        %610 = vset.pattern.permute.xlu0 3
        %611 = vperm.xlu0 %610, %v284
        %v612 = vpop.permute.xlu0 %611
        %613 = vset.pattern.permute.xlu0 3
        %614 = vperm.xlu0 %613, %v285
        %v615 = vpop.permute.xlu0 %614
        %616 = vset.pattern.permute.xlu0 3
        %617 = vperm.xlu0 %616, %v286
        %v618 = vpop.permute.xlu0 %617
        %619 = vset.pattern.permute.xlu0 3
        %620 = vperm.xlu0 %619, %v287
        %v621 = vpop.permute.xlu0 %620
        %622 = vset.pattern.permute.xlu0 3
        %623 = vperm.xlu0 %622, %v288
        %v624 = vpop.permute.xlu0 %623
        %625 = vset.pattern.permute.xlu0 3
        %626 = vperm.xlu0 %625, %v289
        %v627 = vpop.permute.xlu0 %626
        %628 = vset.pattern.permute.xlu0 3
        %629 = vperm.xlu0 %628, %v290
        %v630 = vpop.permute.xlu0 %629
        %631 = vset.pattern.permute.xlu0 3
        %632 = vperm.xlu0 %631, %v291
        %v633 = vpop.permute.xlu0 %632
        %634 = vset.pattern.permute.xlu0 3
        %635 = vperm.xlu0 %634, %v292
        %v636 = vpop.permute.xlu0 %635
        %637 = vset.pattern.permute.xlu0 3
        %638 = vperm.xlu0 %637, %v293
        %v639 = vpop.permute.xlu0 %638
        %640 = vset.pattern.permute.xlu0 3
        %641 = vperm.xlu0 %640, %v294
        %v642 = vpop.permute.xlu0 %641
        %643 = vset.pattern.permute.xlu0 3
        %644 = vperm.xlu0 %643, %v295
        %v645 = vpop.permute.xlu0 %644
        %646 = vset.pattern.permute.xlu0 3
        %647 = vperm.xlu0 %646, %v296
        %v648 = vpop.permute.xlu0 %647
        %649 = vset.pattern.permute.xlu0 3
        %650 = vperm.xlu0 %649, %v297
        %v651 = vpop.permute.xlu0 %650
        %vm652 = vcmp.eq.s32.totalorder %v606, %v299
        %vm653 = vcmp.eq.s32.totalorder %v609, %v299
        %vm654 = vcmp.eq.s32.totalorder %v612, %v299
        %vm655 = vcmp.eq.s32.totalorder %v615, %v299
        %vm656 = vcmp.eq.s32.totalorder %v618, %v299
        %vm657 = vcmp.eq.s32.totalorder %v621, %v299
        %vm658 = vcmp.eq.s32.totalorder %v624, %v299
        %vm659 = vcmp.eq.s32.totalorder %v627, %v299
        %vm660 = vcmp.eq.s32.totalorder %v630, %v299
        %vm661 = vcmp.eq.s32.totalorder %v633, %v299
        %vm662 = vcmp.eq.s32.totalorder %v636, %v299
        %vm663 = vcmp.eq.s32.totalorder %v639, %v299
        %vm664 = vcmp.eq.s32.totalorder %v642, %v299
        %vm665 = vcmp.eq.s32.totalorder %v645, %v299
        %vm666 = vcmp.eq.s32.totalorder %v648, %v299
        %vm667 = vcmp.eq.s32.totalorder %v651, %v299
        %v668 = vsel %vm652, 1, 0
        %v669 = vsel %vm653, 1, 0
        %v670 = vsel %vm654, 1, 0
        %v671 = vsel %vm655, 1, 0
        %v672 = vsel %vm656, 1, 0
        %v673 = vsel %vm657, 1, 0
        %v674 = vsel %vm658, 1, 0
        %v675 = vsel %vm659, 1, 0
        %v676 = vsel %vm660, 1, 0
        %v677 = vsel %vm661, 1, 0
        %v678 = vsel %vm662, 1, 0
        %v679 = vsel %vm663, 1, 0
        %v680 = vsel %vm664, 1, 0
        %v681 = vsel %vm665, 1, 0
        %v682 = vsel %vm666, 1, 0
        %v683 = vsel %vm667, 1, 0
        %v684 = vcvt.s32.f32 %v668
        %v685 = vcvt.s32.f32 %v669
        %v686 = vcvt.s32.f32 %v670
        %v687 = vcvt.s32.f32 %v671
        %v688 = vcvt.s32.f32 %v672
        %v689 = vcvt.s32.f32 %v673
        %v690 = vcvt.s32.f32 %v674
        %v691 = vcvt.s32.f32 %v675
        %v692 = vcvt.s32.f32 %v676
        %v693 = vcvt.s32.f32 %v677
        %v694 = vcvt.s32.f32 %v678
        %v695 = vcvt.s32.f32 %v679
        %v696 = vcvt.s32.f32 %v680
        %v697 = vcvt.s32.f32 %v681
        %v698 = vcvt.s32.f32 %v682
        %v699 = vcvt.s32.f32 %v683
        %716 = vrot.lane.b32.xlu0 %v396, 4
        %v717 = vpop.permute.xlu0 %716
        %718 = vrot.lane.b32.xlu0 %v397, 4
        %v719 = vpop.permute.xlu0 %718
        %720 = vrot.lane.b32.xlu0 %v398, 4
        %v721 = vpop.permute.xlu0 %720
        %722 = vrot.lane.b32.xlu0 %v399, 4
        %v723 = vpop.permute.xlu0 %722
        %724 = vrot.lane.b32.xlu0 %v400, 4
        %v725 = vpop.permute.xlu0 %724
        %726 = vrot.lane.b32.xlu0 %v401, 4
        %v727 = vpop.permute.xlu0 %726
        %728 = vrot.lane.b32.xlu0 %v402, 4
        %v729 = vpop.permute.xlu0 %728
        %730 = vrot.lane.b32.xlu0 %v403, 4
        %v731 = vpop.permute.xlu0 %730
        %732 = vrot.lane.b32.xlu0 %v404, 4
        %v733 = vpop.permute.xlu0 %732
        %734 = vrot.lane.b32.xlu0 %v405, 4
        %v735 = vpop.permute.xlu0 %734
        %736 = vrot.lane.b32.xlu0 %v406, 4
        %v737 = vpop.permute.xlu0 %736
        %738 = vrot.lane.b32.xlu0 %v407, 4
        %v739 = vpop.permute.xlu0 %738
        %740 = vrot.lane.b32.xlu0 %v408, 4
        %v741 = vpop.permute.xlu0 %740
        %742 = vrot.lane.b32.xlu0 %v409, 4
        %v743 = vpop.permute.xlu0 %742
        %744 = vrot.lane.b32.xlu0 %v410, 4
        %v745 = vpop.permute.xlu0 %744
        %746 = vrot.lane.b32.xlu0 %v411, 4
        %v747 = vpop.permute.xlu0 %746
        %780 = vrot.lane.b32.xlu0 %v492, 20
        %v781 = vpop.permute.xlu0 %780
        %782 = vrot.lane.b32.xlu0 %v493, 20
        %v783 = vpop.permute.xlu0 %782
        %784 = vrot.lane.b32.xlu0 %v494, 20
        %v785 = vpop.permute.xlu0 %784
        %786 = vrot.lane.b32.xlu0 %v495, 20
        %v787 = vpop.permute.xlu0 %786
        %788 = vrot.lane.b32.xlu0 %v496, 20
        %v789 = vpop.permute.xlu0 %788
        %790 = vrot.lane.b32.xlu0 %v497, 20
        %v791 = vpop.permute.xlu0 %790
        %792 = vrot.lane.b32.xlu0 %v498, 20
        %v793 = vpop.permute.xlu0 %792
        %794 = vrot.lane.b32.xlu0 %v499, 20
        %v795 = vpop.permute.xlu0 %794
        %796 = vrot.lane.b32.xlu0 %v500, 20
        %v797 = vpop.permute.xlu0 %796
        %798 = vrot.lane.b32.xlu0 %v501, 20
        %v799 = vpop.permute.xlu0 %798
        %800 = vrot.lane.b32.xlu0 %v502, 20
        %v801 = vpop.permute.xlu0 %800
        %802 = vrot.lane.b32.xlu0 %v503, 20
        %v803 = vpop.permute.xlu0 %802
        %804 = vrot.lane.b32.xlu0 %v504, 20
        %v805 = vpop.permute.xlu0 %804
        %806 = vrot.lane.b32.xlu0 %v505, 20
        %v807 = vpop.permute.xlu0 %806
        %808 = vrot.lane.b32.xlu0 %v506, 20
        %v809 = vpop.permute.xlu0 %808
        %810 = vrot.lane.b32.xlu0 %v507, 20
        %v811 = vpop.permute.xlu0 %810
        %844 = vrot.lane.b32.xlu0 %v588, 36
        %v845 = vpop.permute.xlu0 %844
        %846 = vrot.lane.b32.xlu0 %v589, 36
        %v847 = vpop.permute.xlu0 %846
        %848 = vrot.lane.b32.xlu0 %v590, 36
        %v849 = vpop.permute.xlu0 %848
        %850 = vrot.lane.b32.xlu0 %v591, 36
        %v851 = vpop.permute.xlu0 %850
        %852 = vrot.lane.b32.xlu0 %v592, 36
        %v853 = vpop.permute.xlu0 %852
        %854 = vrot.lane.b32.xlu0 %v593, 36
        %v855 = vpop.permute.xlu0 %854
        %856 = vrot.lane.b32.xlu0 %v594, 36
        %v857 = vpop.permute.xlu0 %856
        %858 = vrot.lane.b32.xlu0 %v595, 36
        %v859 = vpop.permute.xlu0 %858
        %860 = vrot.lane.b32.xlu0 %v596, 36
        %v861 = vpop.permute.xlu0 %860
        %862 = vrot.lane.b32.xlu0 %v597, 36
        %v863 = vpop.permute.xlu0 %862
        %864 = vrot.lane.b32.xlu0 %v598, 36
        %v865 = vpop.permute.xlu0 %864
        %866 = vrot.lane.b32.xlu0 %v599, 36
        %v867 = vpop.permute.xlu0 %866
        %868 = vrot.lane.b32.xlu0 %v600, 36
        %v869 = vpop.permute.xlu0 %868
        %870 = vrot.lane.b32.xlu0 %v601, 36
        %v871 = vpop.permute.xlu0 %870
        %872 = vrot.lane.b32.xlu0 %v602, 36
        %v873 = vpop.permute.xlu0 %872
        %874 = vrot.lane.b32.xlu0 %v603, 36
        %v875 = vpop.permute.xlu0 %874
        %908 = vrot.lane.b32.xlu0 %v684, 52
        %v909 = vpop.permute.xlu0 %908
        %910 = vrot.lane.b32.xlu0 %v685, 52
        %v911 = vpop.permute.xlu0 %910
        %912 = vrot.lane.b32.xlu0 %v686, 52
        %v913 = vpop.permute.xlu0 %912
        %914 = vrot.lane.b32.xlu0 %v687, 52
        %v915 = vpop.permute.xlu0 %914
        %916 = vrot.lane.b32.xlu0 %v688, 52
        %v917 = vpop.permute.xlu0 %916
        %918 = vrot.lane.b32.xlu0 %v689, 52
        %v919 = vpop.permute.xlu0 %918
        %920 = vrot.lane.b32.xlu0 %v690, 52
        %v921 = vpop.permute.xlu0 %920
        %922 = vrot.lane.b32.xlu0 %v691, 52
        %v923 = vpop.permute.xlu0 %922
        %924 = vrot.lane.b32.xlu0 %v692, 52
        %v925 = vpop.permute.xlu0 %924
        %926 = vrot.lane.b32.xlu0 %v693, 52
        %v927 = vpop.permute.xlu0 %926
        %928 = vrot.lane.b32.xlu0 %v694, 52
        %v929 = vpop.permute.xlu0 %928
        %930 = vrot.lane.b32.xlu0 %v695, 52
        %v931 = vpop.permute.xlu0 %930
        %932 = vrot.lane.b32.xlu0 %v696, 52
        %v933 = vpop.permute.xlu0 %932
        %934 = vrot.lane.b32.xlu0 %v697, 52
        %v935 = vpop.permute.xlu0 %934
        %936 = vrot.lane.b32.xlu0 %v698, 52
        %v937 = vpop.permute.xlu0 %936
        %938 = vrot.lane.b32.xlu0 %v699, 52
        %v939 = vpop.permute.xlu0 %938
        %vm956 = vcmask 31744
        %v957 = vsel %vm956, %v300, %v717
        %v958 = vsel %vm956, %v301, %v719
        %v959 = vsel %vm956, %v302, %v721
        %v960 = vsel %vm956, %v303, %v723
        %v961 = vsel %vm956, %v304, %v725
        %v962 = vsel %vm956, %v305, %v727
        %v963 = vsel %vm956, %v306, %v729
        %v964 = vsel %vm956, %v307, %v731
        %v965 = vsel %vm956, %v308, %v733
        %v966 = vsel %vm956, %v309, %v735
        %v967 = vsel %vm956, %v310, %v737
        %v968 = vsel %vm956, %v311, %v739
        %v969 = vsel %vm956, %v312, %v741
        %v970 = vsel %vm956, %v313, %v743
        %v971 = vsel %vm956, %v314, %v745
        %v972 = vsel %vm956, %v315, %v747
        %vm973 = vcmask 162816
        %v974 = vsel %vm973, %v957, %v781
        %v975 = vsel %vm973, %v958, %v783
        %v976 = vsel %vm973, %v959, %v785
        %v977 = vsel %vm973, %v960, %v787
        %v978 = vsel %vm973, %v961, %v789
        %v979 = vsel %vm973, %v962, %v791
        %v980 = vsel %vm973, %v963, %v793
        %v981 = vsel %vm973, %v964, %v795
        %v982 = vsel %vm973, %v965, %v797
        %v983 = vsel %vm973, %v966, %v799
        %v984 = vsel %vm973, %v967, %v801
        %v985 = vsel %vm973, %v968, %v803
        %v986 = vsel %vm973, %v969, %v805
        %v987 = vsel %vm973, %v970, %v807
        %v988 = vsel %vm973, %v971, %v809
        %v989 = vsel %vm973, %v972, %v811
        %vm990 = vcmask 293888
        %v991 = vsel %vm990, %v974, %v845
        %v992 = vsel %vm990, %v975, %v847
        %v993 = vsel %vm990, %v976, %v849
        %v994 = vsel %vm990, %v977, %v851
        %v995 = vsel %vm990, %v978, %v853
        %v996 = vsel %vm990, %v979, %v855
        %v997 = vsel %vm990, %v980, %v857
        %v998 = vsel %vm990, %v981, %v859
        %v999 = vsel %vm990, %v982, %v861
        %v1000 = vsel %vm990, %v983, %v863
        %v1001 = vsel %vm990, %v984, %v865
        %v1002 = vsel %vm990, %v985, %v867
        %v1003 = vsel %vm990, %v986, %v869
        %v1004 = vsel %vm990, %v987, %v871
        %v1005 = vsel %vm990, %v988, %v873
        %v1006 = vsel %vm990, %v989, %v875
        %vm1007 = vcmask 424960
        %v1008 = vsel %vm1007, %v991, %v909
        %v1009 = vsel %vm1007, %v992, %v911
        %v1010 = vsel %vm1007, %v993, %v913
        %v1011 = vsel %vm1007, %v994, %v915
        %v1012 = vsel %vm1007, %v995, %v917
        %v1013 = vsel %vm1007, %v996, %v919
        %v1014 = vsel %vm1007, %v997, %v921
        %v1015 = vsel %vm1007, %v998, %v923
        %v1016 = vsel %vm1007, %v999, %v925
        %v1017 = vsel %vm1007, %v1000, %v927
        %v1018 = vsel %vm1007, %v1001, %v929
        %v1019 = vsel %vm1007, %v1002, %v931
        %v1020 = vsel %vm1007, %v1003, %v933
        %v1021 = vsel %vm1007, %v1004, %v935
        %v1022 = vsel %vm1007, %v1005, %v937
        %v1023 = vsel %vm1007, %v1006, %v939
        %v1024 = vld [vmem:[%s3] sm:$0xff]
        %v1025 = vld [vmem:[%s3 + $0x8] sm:$0xff]
        %v1026 = vld [vmem:[%s3 + $0x10] sm:$0xff]
        %v1027 = vld [vmem:[%s3 + $0x18] sm:$0xff]
        %v1028 = vld [vmem:[%s3 + $0x20] sm:$0xff]
        %v1029 = vld [vmem:[%s3 + $0x28] sm:$0xff]
        %v1030 = vld [vmem:[%s3 + $0x30] sm:$0xff]
        %v1031 = vld [vmem:[%s3 + $0x38] sm:$0xff]
        %v1032 = vld [vmem:[%s3 + $0x40] sm:$0xff]
        %v1033 = vld [vmem:[%s3 + $0x48] sm:$0xff]
        %v1034 = vld [vmem:[%s3 + $0x50] sm:$0xff]
        %v1035 = vld [vmem:[%s3 + $0x58] sm:$0xff]
        %v1036 = vld [vmem:[%s3 + $0x60] sm:$0xff]
        %v1037 = vld [vmem:[%s3 + $0x68] sm:$0xff]
        %v1038 = vld [vmem:[%s3 + $0x70] sm:$0xff]
        %v1039 = vld [vmem:[%s3 + $0x78] sm:$0xff]
        %v1040 = vld [vmem:[%s3 + $0x80] sm:$0xf]
        %v1041 = vld [vmem:[%s3 + $0x88] sm:$0xf]
        %v1042 = vld [vmem:[%s4] sm:$0x3]
        %v1044 = vlaneseq
        %v1045 = vshrl.u32 %v1044, 7
        %v1046 = vsub.s32 0, %v1045
        %v1047 = vrot.slane %v1042, %v1046
        %v1048 = vlaneseq
        %v1049 = vshrl.u32 %v1048, 7
        %v1050 = vsub.s32 1, %v1049
        %v1051 = vrot.slane %v1042, %v1050
        %vm1054 = vcmask 556032
        %v1056 = vsel %vm1054, %v1008, 0
        %v1059 = vsel %vm1054, %v1009, 0
        %v1062 = vsel %vm1054, %v1010, 0
        %v1065 = vsel %vm1054, %v1011, 0
        %v1068 = vsel %vm1054, %v1012, 0
        %v1071 = vsel %vm1054, %v1013, 0
        %v1074 = vsel %vm1054, %v1014, 0
        %v1077 = vsel %vm1054, %v1015, 0
        %v1080 = vsel %vm1054, %v1016, 0
        %v1083 = vsel %vm1054, %v1017, 0
        %v1086 = vsel %vm1054, %v1018, 0
        %v1089 = vsel %vm1054, %v1019, 0
        %v1092 = vsel %vm1054, %v1020, 0
        %v1095 = vsel %vm1054, %v1021, 0
        %v1098 = vsel %vm1054, %v1022, 0
        %v1101 = vsel %vm1054, %v1023, 0
        %vm1103 = vcmask 1043456
        %v1105 = vsel %vm1103, %v1040, 0
        %v1108 = vsel %vm1103, %v1041, 0
        %1110 = vmatprep.subr.mxu0 %v1025
        %1111 = vmatpush1.msra.mxu0 %v1024
        %1112 = vmatprep.subr.mxu0 %v1027
        %1113 = vmatpush1.msra.mxu0 %v1026
        %1114 = vmatprep.subr.mxu0 %v1029
        %1115 = vmatpush1.msra.mxu0 %v1028
        %1116 = vmatprep.subr.mxu0 %v1031
        %1117 = vmatpush1.msra.mxu0 %v1030
        %1118 = vmatprep.subr.mxu0 %v1033
        %1119 = vmatpush1.msra.mxu0 %v1032
        %1120 = vmatprep.subr.mxu0 %v1035
        %1121 = vmatpush1.msra.mxu0 %v1034
        %1122 = vmatprep.subr.mxu0 %v1037
        %1123 = vmatpush1.msra.mxu0 %v1036
        %1124 = vmatprep.subr.mxu0 %v1039
        %1125 = vmatpush1.msra.mxu0 %v1038
        %1126 = vmatprep.subr.mxu0 %v1108
        %1127 = vmatpush1.msra.mxu0 %v1105
        %1128 = vmatprep.subr.mxu0 0.0
        %1129 = vmatpush1.msra.mxu0 0.0
        %1130 = vmatprep.subr.mxu0 0.0
        %1131 = vmatpush1.msra.mxu0 0.0
        %1132 = vmatprep.subr.mxu0 0.0
        %1133 = vmatpush1.msra.mxu0 0.0
        %1134 = vmatprep.subr.mxu0 0.0
        %1135 = vmatpush1.msra.mxu0 0.0
        %1136 = vmatprep.subr.mxu0 0.0
        %1137 = vmatpush1.msra.mxu0 0.0
        %1138 = vmatprep.subr.mxu0 0.0
        %1139 = vmatpush1.msra.mxu0 0.0
        %1140 = vmatprep.subr.mxu0 0.0
        %1141 = vmatpush1.msra.mxu0 0.0
        %1142 = vmatprep.subr.mxu0 0.0
        %1143 = vmatpush1.msra.mxu0 0.0
        %1144 = vmatprep.subr.mxu0 0.0
        %1145 = vmatpush1.msra.mxu0 0.0
        %1146 = vmatprep.subr.mxu0 0.0
        %1147 = vmatpush1.msra.mxu0 0.0
        %1148 = vmatprep.subr.mxu0 0.0
        %1149 = vmatpush1.msra.mxu0 0.0
        %1150 = vmatprep.subr.mxu0 0.0
        %1151 = vmatpush1.msra.mxu0 0.0
        %1152 = vmatprep.subr.mxu0 0.0
        %1153 = vmatpush1.msra.mxu0 0.0
        %1154 = vmatprep.subr.mxu0 0.0
        %1155 = vmatpush1.msra.mxu0 0.0
        %1156 = vmatprep.subr.mxu0 0.0
        %1157 = vmatpush1.msra.mxu0 0.0
        %1158 = vmatprep.subr.mxu0 0.0
        %1159 = vmatpush1.msra.mxu0 0.0
        %1160 = vmatprep.subr.mxu0 0.0
        %1161 = vmatpush1.msra.mxu0 0.0
        %1162 = vmatprep.subr.mxu0 0.0
        %1163 = vmatpush1.msra.mxu0 0.0
        %1164 = vmatprep.subr.mxu0 0.0
        %1165 = vmatpush1.msra.mxu0 0.0
        %1166 = vmatprep.subr.mxu0 0.0
        %1167 = vmatpush1.msra.mxu0 0.0
        %1168 = vmatprep.subr.mxu0 0.0
        %1169 = vmatpush1.msra.mxu0 0.0
        %1170 = vmatprep.subr.mxu0 0.0
        %1171 = vmatpush1.msra.mxu0 0.0
        %1172 = vmatprep.subr.mxu0 0.0
        %1173 = vmatpush1.msra.mxu0 0.0
        %1174 = vmatprep.mubr.f32.mxu0 0.0
        %1175 = vmatmul.mubr.f32.gmra.mrb[0].mxu0 %v1056
        %v1176 = vpop.f32.mrb[0].mxu0
        %v1177 = vadd.f32 %v1047, %v1176
        %v1178 = vpop.f32.mrb[0].mxu0
        %v1179 = vadd.f32 %v1051, %v1178
        %1180 = vmatprep.mubr.f32.mxu0 0.0
        %1181 = vmatmul.mubr.f32.gmra.mrb[0].mxu0 %v1059
        %v1182 = vpop.f32.mrb[0].mxu0
        %v1183 = vadd.f32 %v1047, %v1182
        %v1184 = vpop.f32.mrb[0].mxu0
        %v1185 = vadd.f32 %v1051, %v1184
        %1186 = vmatprep.mubr.f32.mxu0 0.0
        %1187 = vmatmul.mubr.f32.gmra.mrb[0].mxu0 %v1062
        %v1188 = vpop.f32.mrb[0].mxu0
        %v1189 = vadd.f32 %v1047, %v1188
        %v1190 = vpop.f32.mrb[0].mxu0
        %v1191 = vadd.f32 %v1051, %v1190
        %1192 = vmatprep.mubr.f32.mxu0 0.0
        %1193 = vmatmul.mubr.f32.gmra.mrb[0].mxu0 %v1065
        %v1194 = vpop.f32.mrb[0].mxu0
        %v1195 = vadd.f32 %v1047, %v1194
        %v1196 = vpop.f32.mrb[0].mxu0
        %v1197 = vadd.f32 %v1051, %v1196
        %1198 = vmatprep.mubr.f32.mxu0 0.0
        %1199 = vmatmul.mubr.f32.gmra.mrb[0].mxu0 %v1068
        %v1200 = vpop.f32.mrb[0].mxu0
        %v1201 = vadd.f32 %v1047, %v1200
        %v1202 = vpop.f32.mrb[0].mxu0
        %v1203 = vadd.f32 %v1051, %v1202
        %1204 = vmatprep.mubr.f32.mxu0 0.0
        %1205 = vmatmul.mubr.f32.gmra.mrb[0].mxu0 %v1071
        %v1206 = vpop.f32.mrb[0].mxu0
        %v1207 = vadd.f32 %v1047, %v1206
        %v1208 = vpop.f32.mrb[0].mxu0
        %v1209 = vadd.f32 %v1051, %v1208
        %1210 = vmatprep.mubr.f32.mxu0 0.0
        %1211 = vmatmul.mubr.f32.gmra.mrb[0].mxu0 %v1074
        %v1212 = vpop.f32.mrb[0].mxu0
        %v1213 = vadd.f32 %v1047, %v1212
        %v1214 = vpop.f32.mrb[0].mxu0
        %v1215 = vadd.f32 %v1051, %v1214
        %1216 = vmatprep.mubr.f32.mxu0 0.0
        %1217 = vmatmul.mubr.f32.gmra.mrb[0].mxu0 %v1077
        %v1218 = vpop.f32.mrb[0].mxu0
        %v1219 = vadd.f32 %v1047, %v1218
        %v1220 = vpop.f32.mrb[0].mxu0
        %v1221 = vadd.f32 %v1051, %v1220
        %1222 = vmatprep.mubr.f32.mxu0 0.0
        %1223 = vmatmul.mubr.f32.gmra.mrb[0].mxu0 %v1080
        %v1224 = vpop.f32.mrb[0].mxu0
        %v1225 = vadd.f32 %v1047, %v1224
        %v1226 = vpop.f32.mrb[0].mxu0
        %v1227 = vadd.f32 %v1051, %v1226
        %1228 = vmatprep.mubr.f32.mxu0 0.0
        %1229 = vmatmul.mubr.f32.gmra.mrb[0].mxu0 %v1083
        %v1230 = vpop.f32.mrb[0].mxu0
        %v1231 = vadd.f32 %v1047, %v1230
        %v1232 = vpop.f32.mrb[0].mxu0
        %v1233 = vadd.f32 %v1051, %v1232
        %1234 = vmatprep.mubr.f32.mxu0 0.0
        %1235 = vmatmul.mubr.f32.gmra.mrb[0].mxu0 %v1086
        %v1236 = vpop.f32.mrb[0].mxu0
        %v1237 = vadd.f32 %v1047, %v1236
        %v1238 = vpop.f32.mrb[0].mxu0
        %v1239 = vadd.f32 %v1051, %v1238
        %1240 = vmatprep.mubr.f32.mxu0 0.0
        %1241 = vmatmul.mubr.f32.gmra.mrb[0].mxu0 %v1089
        %v1242 = vpop.f32.mrb[0].mxu0
        %v1243 = vadd.f32 %v1047, %v1242
        %v1244 = vpop.f32.mrb[0].mxu0
        %v1245 = vadd.f32 %v1051, %v1244
        %1246 = vmatprep.mubr.f32.mxu0 0.0
        %1247 = vmatmul.mubr.f32.gmra.mrb[0].mxu0 %v1092
        %v1248 = vpop.f32.mrb[0].mxu0
        %v1249 = vadd.f32 %v1047, %v1248
        %v1250 = vpop.f32.mrb[0].mxu0
        %v1251 = vadd.f32 %v1051, %v1250
        %1252 = vmatprep.mubr.f32.mxu0 0.0
        %1253 = vmatmul.mubr.f32.gmra.mrb[0].mxu0 %v1095
        %v1254 = vpop.f32.mrb[0].mxu0
        %v1255 = vadd.f32 %v1047, %v1254
        %v1256 = vpop.f32.mrb[0].mxu0
        %v1257 = vadd.f32 %v1051, %v1256
        %1258 = vmatprep.mubr.f32.mxu0 0.0
        %1259 = vmatmul.mubr.f32.gmra.mrb[0].mxu0 %v1098
        %v1260 = vpop.f32.mrb[0].mxu0
        %v1261 = vadd.f32 %v1047, %v1260
        %v1262 = vpop.f32.mrb[0].mxu0
        %v1263 = vadd.f32 %v1051, %v1262
        %1264 = vmatprep.mubr.f32.mxu0 0.0
        %1265 = vmatmul.mubr.f32.gmra.mrb[0].mxu0 %v1101
        %v1266 = vpop.f32.mrb[0].mxu0
        %v1267 = vadd.f32 %v1047, %v1266
        %v1268 = vpop.f32.mrb[0].mxu0
        %v1269 = vadd.f32 %v1051, %v1268
        %1270 = vdwg.mxu0
        %1271 = vst [vmem:[%s229] sm:$0xff] %v1177
        %1272 = vst [vmem:[%s229 + $0x8] sm:$0xff] %v1179
        %1273 = vst [vmem:[%s229 + $0x10] sm:$0xff] %v1183
        %1274 = vst [vmem:[%s229 + $0x18] sm:$0xff] %v1185
        %1275 = vst [vmem:[%s229 + $0x20] sm:$0xff] %v1189
        %1276 = vst [vmem:[%s229 + $0x28] sm:$0xff] %v1191
        %1277 = vst [vmem:[%s229 + $0x30] sm:$0xff] %v1195
        %1278 = vst [vmem:[%s229 + $0x38] sm:$0xff] %v1197
        %1279 = vst [vmem:[%s229 + $0x40] sm:$0xff] %v1201
        %1280 = vst [vmem:[%s229 + $0x48] sm:$0xff] %v1203
        %1281 = vst [vmem:[%s229 + $0x50] sm:$0xff] %v1207
        %1282 = vst [vmem:[%s229 + $0x58] sm:$0xff] %v1209
        %1283 = vst [vmem:[%s229 + $0x60] sm:$0xff] %v1213
        %1284 = vst [vmem:[%s229 + $0x68] sm:$0xff] %v1215
        %1285 = vst [vmem:[%s229 + $0x70] sm:$0xff] %v1219
        %1286 = vst [vmem:[%s229 + $0x78] sm:$0xff] %v1221
        %1287 = vst [vmem:[%s229 + $0x80] sm:$0xff] %v1225
        %1288 = vst [vmem:[%s229 + $0x88] sm:$0xff] %v1227
        %1289 = vst [vmem:[%s229 + $0x90] sm:$0xff] %v1231
        %1290 = vst [vmem:[%s229 + $0x98] sm:$0xff] %v1233
        %1291 = vst [vmem:[%s229 + $0xa0] sm:$0xff] %v1237
        %1292 = vst [vmem:[%s229 + $0xa8] sm:$0xff] %v1239
        %1293 = vst [vmem:[%s229 + $0xb0] sm:$0xff] %v1243
        %1294 = vst [vmem:[%s229 + $0xb8] sm:$0xff] %v1245
        %1295 = vst [vmem:[%s229 + $0xc0] sm:$0xff] %v1249
        %1296 = vst [vmem:[%s229 + $0xc8] sm:$0xff] %v1251
        %1297 = vst [vmem:[%s229 + $0xd0] sm:$0xff] %v1255
        %1298 = vst [vmem:[%s229 + $0xd8] sm:$0xff] %v1257
        %1299 = vst [vmem:[%s229 + $0xe0] sm:$0xff] %v1261
        %1300 = vst [vmem:[%s229 + $0xe8] sm:$0xff] %v1263
        %1301 = vst [vmem:[%s229 + $0xf0] sm:$0xff] %v1267
        %1302 = vst [vmem:[%s229 + $0xf8] sm:$0xff] %v1269
        %s1303 = sand.u32 %s119, 1
        %s1304 = sand.u32 %s119, 1
        %s1305 = smul.addr %s1304, 256
        %s1306 = scalar_lea.vmem [#allocation4], %s1305
        // Predicated region
        $region37: #{input_embed.1} parent=35 // pred_check
          %p1307 = pneg %p129
        $region38: #{input_embed.1} parent=35 // pred_check_branch
          %1309 = sbr.rel (%p1307) target = $region40
        $region39: #{input_embed.1} parent=35 // pred_region
          %s1310 = smul.u32 16, %s17
          %s1311 = ssub.s32 25, %s1310
          %p1312 = scmp.lt.s32.totalorder %s1311, 16
          %s1313 = scalar_select %p1312, %s1311, 16
          %s1314 = smul.u32 128, %s1313
          %s1315 = smul.u32 %s1314, 2
          %p1316 = scmp.ne.s32.totalorder 0, %s1315
          %s1317 = smul.addr %s1310, 2
          %s1318 = smul.addr %s1317, 8
          %s1319 = scalar_lea.vmem %s5, %s1318
          // Predicated region
          $region41: #{input_embed.1} parent=39 // pred_check
            %p1320 = pneg %p1316
          $region42: #{input_embed.1} parent=39 // pred_check_branch
            %1322 = sbr.rel (%p1320) target = $region44
          $region43: #{input_embed.1} parent=39 // pred_region
            // Predicated region
            $region45: #{input_embed.1} parent=43 // pred_check
              _
            $region46: #{input_embed.1} parent=43 // pred_check_branch
              %1324 = sbr.rel (0) target = $region48
            $region47: #{input_embed.1} parent=43 // pred_region
              %s1325 = sshrl.u32 %s1313, 4
              // While loop
              $region49: #{input_embed.1} parent=47 // loop_pre_header
                _
              $region50: #{input_embed.1} parent=47 // loop_header
                %s1327 = sphi 0, %s1329
                %p1328 = scmp.ge.s32.totalorder %s1327, %s1325
                %s1332 = sphi 0, %s1401
                %s1333 = sphi %s1306, %s1404
                %s1334 = sphi %s1319, %s1405
              $region51: #{input_embed.1} parent=47 // loop_header_branch
                %1331 = sbr.rel (%p1328) target = $region55
              $region52: #{input_embed.1} parent=47 // loop_body
                %v1335 = vld [vmem:[%s1333] sm:$0xff]
                %1336 = vst [vmem:[%s1334] sm:$0xff] %v1335
                %v1337 = vld [vmem:[%s1333 + $0x10] sm:$0xff]
                %1338 = vst [vmem:[%s1334 + $0x10] sm:$0xff] %v1337
                %v1339 = vld [vmem:[%s1333 + $0x20] sm:$0xff]
                %1340 = vst [vmem:[%s1334 + $0x20] sm:$0xff] %v1339
                %v1341 = vld [vmem:[%s1333 + $0x30] sm:$0xff]
                %1342 = vst [vmem:[%s1334 + $0x30] sm:$0xff] %v1341
                %v1343 = vld [vmem:[%s1333 + $0x40] sm:$0xff]
                %1344 = vst [vmem:[%s1334 + $0x40] sm:$0xff] %v1343
                %v1345 = vld [vmem:[%s1333 + $0x50] sm:$0xff]
                %1346 = vst [vmem:[%s1334 + $0x50] sm:$0xff] %v1345
                %v1347 = vld [vmem:[%s1333 + $0x60] sm:$0xff]
                %1348 = vst [vmem:[%s1334 + $0x60] sm:$0xff] %v1347
                %v1349 = vld [vmem:[%s1333 + $0x70] sm:$0xff]
                %1350 = vst [vmem:[%s1334 + $0x70] sm:$0xff] %v1349
                %v1351 = vld [vmem:[%s1333 + $0x80] sm:$0xff]
                %1352 = vst [vmem:[%s1334 + $0x80] sm:$0xff] %v1351
                %v1353 = vld [vmem:[%s1333 + $0x90] sm:$0xff]
                %1354 = vst [vmem:[%s1334 + $0x90] sm:$0xff] %v1353
                %v1355 = vld [vmem:[%s1333 + $0xa0] sm:$0xff]
                %1356 = vst [vmem:[%s1334 + $0xa0] sm:$0xff] %v1355
                %v1357 = vld [vmem:[%s1333 + $0xb0] sm:$0xff]
                %1358 = vst [vmem:[%s1334 + $0xb0] sm:$0xff] %v1357
                %v1359 = vld [vmem:[%s1333 + $0xc0] sm:$0xff]
                %1360 = vst [vmem:[%s1334 + $0xc0] sm:$0xff] %v1359
                %v1361 = vld [vmem:[%s1333 + $0xd0] sm:$0xff]
                %1362 = vst [vmem:[%s1334 + $0xd0] sm:$0xff] %v1361
                %v1363 = vld [vmem:[%s1333 + $0xe0] sm:$0xff]
                %1364 = vst [vmem:[%s1334 + $0xe0] sm:$0xff] %v1363
                %v1365 = vld [vmem:[%s1333 + $0xf0] sm:$0xff]
                %1366 = vst [vmem:[%s1334 + $0xf0] sm:$0xff] %v1365
                %v1367 = vld [vmem:[%s1333 + $0x8] sm:$0xff]
                %1368 = vst [vmem:[%s1334 + $0x8] sm:$0xff] %v1367
                %v1369 = vld [vmem:[%s1333 + $0x18] sm:$0xff]
                %1370 = vst [vmem:[%s1334 + $0x18] sm:$0xff] %v1369
                %v1371 = vld [vmem:[%s1333 + $0x28] sm:$0xff]
                %1372 = vst [vmem:[%s1334 + $0x28] sm:$0xff] %v1371
                %v1373 = vld [vmem:[%s1333 + $0x38] sm:$0xff]
                %1374 = vst [vmem:[%s1334 + $0x38] sm:$0xff] %v1373
                %v1375 = vld [vmem:[%s1333 + $0x48] sm:$0xff]
                %1376 = vst [vmem:[%s1334 + $0x48] sm:$0xff] %v1375
                %v1377 = vld [vmem:[%s1333 + $0x58] sm:$0xff]
                %1378 = vst [vmem:[%s1334 + $0x58] sm:$0xff] %v1377
                %v1379 = vld [vmem:[%s1333 + $0x68] sm:$0xff]
                %1380 = vst [vmem:[%s1334 + $0x68] sm:$0xff] %v1379
                %v1381 = vld [vmem:[%s1333 + $0x78] sm:$0xff]
                %1382 = vst [vmem:[%s1334 + $0x78] sm:$0xff] %v1381
                %v1383 = vld [vmem:[%s1333 + $0x88] sm:$0xff]
                %1384 = vst [vmem:[%s1334 + $0x88] sm:$0xff] %v1383
                %v1385 = vld [vmem:[%s1333 + $0x98] sm:$0xff]
                %1386 = vst [vmem:[%s1334 + $0x98] sm:$0xff] %v1385
                %v1387 = vld [vmem:[%s1333 + $0xa8] sm:$0xff]
                %1388 = vst [vmem:[%s1334 + $0xa8] sm:$0xff] %v1387
                %v1389 = vld [vmem:[%s1333 + $0xb8] sm:$0xff]
                %1390 = vst [vmem:[%s1334 + $0xb8] sm:$0xff] %v1389
                %v1391 = vld [vmem:[%s1333 + $0xc8] sm:$0xff]
                %1392 = vst [vmem:[%s1334 + $0xc8] sm:$0xff] %v1391
                %v1393 = vld [vmem:[%s1333 + $0xd8] sm:$0xff]
                %1394 = vst [vmem:[%s1334 + $0xd8] sm:$0xff] %v1393
                %v1395 = vld [vmem:[%s1333 + $0xe8] sm:$0xff]
                %1396 = vst [vmem:[%s1334 + $0xe8] sm:$0xff] %v1395
                %v1397 = vld [vmem:[%s1333 + $0xf8] sm:$0xff]
                %1398 = vst [vmem:[%s1334 + $0xf8] sm:$0xff] %v1397
                %s1399 = sadd.s32 1, %s1332
                %p1400 = scmp.ge.s32.totalorder %s1399, %s1325
                %s1401 = scalar_select %p1400, 0, %s1399
                %s1402 = smul.u32 %s1401, 256
                %s1403 = smul.u32 %s1401, 256
                %s1404 = scalar_lea.vmem %s1306, %s1402 [#allocation4]
                %s1405 = scalar_lea.vmem %s1319, %s1403
              $region53: #{input_embed.1} parent=47 // loop_footer
                %s1329 = sadd.s32 %s1327, 1
              $region54: #{input_embed.1} parent=47 // loop_footer_branch
                %1326 = sbr.rel target = $region50
              $region55: #{input_embed.1} parent=47 // loop_exit
                _
              %s1406 = sshrl.u32 %s1313, 4
              %s1407 = sand.u32 %s1313, 15
              %s1408 = smul.u32 %s1406, 16
              %s1409 = smul.u32 16, %s1408
              %s1410 = scalar_lea.vmem %s1306, %s1409 [#allocation4]
              %s1411 = smul.u32 16, %s1408
              %s1412 = scalar_lea.vmem %s1319, %s1411
              // While loop
              $region56: #{input_embed.1} parent=47 // loop_pre_header
                _
              $region57: #{input_embed.1} parent=47 // loop_header
                %s1414 = sphi 0, %s1416
                %p1415 = scmp.ge.s32.totalorder %s1414, %s1407
                %s1419 = sphi 0, %s1428
                %s1420 = sphi %s1410, %s1431
                %s1421 = sphi %s1412, %s1432
              $region58: #{input_embed.1} parent=47 // loop_header_branch
                %1418 = sbr.rel (%p1415) target = $region62
              $region59: #{input_embed.1} parent=47 // loop_body
                %v1422 = vld [vmem:[%s1420] sm:$0xff]
                %1423 = vst [vmem:[%s1421] sm:$0xff] %v1422
                %v1424 = vld [vmem:[%s1420 + $0x8] sm:$0xff]
                %1425 = vst [vmem:[%s1421 + $0x8] sm:$0xff] %v1424
                %s1426 = sadd.s32 1, %s1419
                %p1427 = scmp.ge.s32.totalorder %s1426, %s1407
                %s1428 = scalar_select %p1427, 0, %s1426
                %s1429 = smul.u32 %s1428, 16
                %s1430 = smul.u32 %s1428, 16
                %s1431 = scalar_lea.vmem %s1410, %s1429 [#allocation4]
                %s1432 = scalar_lea.vmem %s1412, %s1430
              $region60: #{input_embed.1} parent=47 // loop_footer
                %s1416 = sadd.s32 %s1414, 1
              $region61: #{input_embed.1} parent=47 // loop_footer_branch
                %1413 = sbr.rel target = $region57
              $region62: #{input_embed.1} parent=47 // loop_exit
                _
            $region48: #{input_embed.1} parent=43 // pred_fallthru
              _
            // Predicated region
            $region63: #{input_embed.1} parent=43 // pred_check
              _
            $region64: #{input_embed.1} parent=43 // pred_check_branch
              %1434 = sbr.rel target = $region66
            $region65: #{input_embed.1} parent=43 // pred_region
              _
            $region66: #{input_embed.1} parent=43 // pred_fallthru
              _
          $region44: #{input_embed.1} parent=39 // pred_fallthru
            _
          %1435 = vnop
        $region40: #{input_embed.1} parent=35 // pred_fallthru
          _
      $region36: #{input_embed.1} parent=5 // pred_fallthru
        _
      %p1436 = scmp.le.s32.totalorder 2, %s12
      // Predicated region
      $region67: #{input_embed.1} parent=5 // pred_check
        %p1437 = pneg %p1436
      $region68: #{input_embed.1} parent=5 // pred_check_branch
        %1439 = sbr.rel (%p1437) target = $region70
      $region69: #{input_embed.1} parent=5 // pred_region
        %s1440 = ssub.s32 %s12, 2
        // Predicated region
        $region71: #{input_embed.1} parent=69 // pred_check
          %p1441 = pneg %p135
        $region72: #{input_embed.1} parent=69 // pred_check_branch
          %1443 = sbr.rel (%p1441) target = $region74
        $region73: #{input_embed.1} parent=69 // pred_region
          %s1444 = sand.u32 %s120, 1
          %s1445 = sand.u32 %s120, 1
          %s1446 = smul.addr %s1445, 256
          %s1447 = scalar_lea.vmem [#allocation4], %s1446
        $region74: #{input_embed.1} parent=69 // pred_fallthru
          _
      $region70: #{input_embed.1} parent=5 // pred_fallthru
        _
    $region6: #{input_embed.1} parent=1 // loop_footer
      %s16 = sadd.s32 1, %s12
    $region7: #{input_embed.1} parent=1 // loop_footer_branch
      %11 = sbr.rel target = $region3
    $region8: #{input_embed.1} parent=1 // loop_exit
      _

</llo_original>
